<compile_context>
chip_gen: v6e
topology: v6e:2x2x1
jax: 0.10.0
libtpu: 0.0.40
codegen_flags: <defaults>
</compile_context>

<pallas_src>
import functools

import jax
import jax.numpy as jnp
from jax import lax
from jax.experimental import pallas as pl
from jax.experimental.pallas import tpu as pltpu

# torchvision rgb_to_grayscale weights
_RW, _GW, _BW = 0.2989, 0.587, 0.114

_LANES = 128
# 1024 rows * 128 lanes = 128K px per tile. f32 block = 3*1024*128*4 = 1.5 MiB;
# (2 in + 2 out) * double-buffered = ~12 MiB resident.
_TILE_ROWS_CAP = 1024


def _round_up(x, m):
    return (x + m - 1) // m * m


def _pick_chunk_rows(tile_rows):
    """Largest sublane-aligned chunk that divides tile_rows (static)."""
    for c in (64, 32, 16, 8):
        if tile_rows % c == 0:
            return c
    return tile_rows


def _grayscale_kernel(a_ref, n_ref, ao_ref, no_ref):
    """Blocks are (1, 3, TILE_ROWS, 128): each channel plane is lane/sublane dense."""
    tile_rows = a_ref.shape[2]
    chunk = _pick_chunk_rows(tile_rows)
    n_chunks = tile_rows // chunk

    def convert(x_ref, o_ref):
        def body(c, carry):
            r0 = pl.multiple_of(c * chunk, chunk)
            rows = pl.ds(r0, chunk)
            rf = x_ref[0, 0, rows, :].astype(jnp.float32)
            gf = x_ref[0, 1, rows, :].astype(jnp.float32)
            bf = x_ref[0, 2, rows, :].astype(jnp.float32)
            # Weighted sum in f32; plain cast (truncation for ints) to match
            # torchvision's .to(dtype).
            gray = (_RW * rf + _GW * gf + _BW * bf).astype(o_ref.dtype)
            o_ref[0, 0, rows, :] = gray
            o_ref[0, 1, rows, :] = gray
            o_ref[0, 2, rows, :] = gray
            return carry

        # Short fixed trip count: fully unrolled so each gray chunk lives in
        # registers across its three channel stores.
        lax.fori_loop(0, n_chunks, body, 0, unroll=True)

    convert(a_ref, ao_ref)
    convert(n_ref, no_ref)


def _grayscale_pallas(anchor, nanchor):
    """Grayscale both (B, 3, H, W) inputs; returns same shapes/dtypes."""
    B, C, H, W = anchor.shape
    hw = H * W
    hw_pad = _round_up(hw, _LANES)     # only pad to the lane multiple
    rows = hw_pad // _LANES

    def to_planes(x):
        x = x.reshape(B, C, hw)
        if hw_pad != hw:
            x = jnp.pad(x, ((0, 0), (0, 0), (0, hw_pad - hw)))
        return x.reshape(B, C, rows, _LANES)

    a = to_planes(anchor)
    n = to_planes(nanchor)

    # Row tile: full extent when tiny, otherwise a multiple of 8 sublanes,
    # capped for VMEM. Ragged last tile is handled by Pallas (elementwise, so
    # padded reads / masked writes are safe).
    if rows <= 8:
        tile_rows = rows
    else:
        tile_rows = min(_round_up(rows, 8), _TILE_ROWS_CAP)
    num_tiles = pl.cdiv(rows, tile_rows)

    # v7x megacore: guarantee >= 2 grid steps so both TensorCores get work.
    if B * num_tiles < 2 and rows >= 16:
        tile_rows = _round_up(pl.cdiv(rows, 2), 8)
        num_tiles = pl.cdiv(rows, tile_rows)

    grid = (B, num_tiles)
    spec = pl.BlockSpec((1, C, tile_rows, _LANES), lambda b, t: (b, 0, t, 0))

    out_a, out_n = pl.pallas_call(
        _grayscale_kernel,
        out_shape=(
            jax.ShapeDtypeStruct(a.shape, anchor.dtype),
            jax.ShapeDtypeStruct(n.shape, nanchor.dtype),
        ),
        grid_spec=pltpu.PrefetchScalarGridSpec(
            num_scalar_prefetch=0,
            grid=grid,
            in_specs=[spec, spec],
            out_specs=(spec, spec),
        ),
        # In-place update: outputs alias the (reshaped) inputs. With donation
        # at the jit boundary this avoids a second full-image allocation and
        # lets the passthrough branch of lax.cond alias rather than copy.
        input_output_aliases={0: 0, 1: 1},
        compiler_params=pltpu.CompilerParams(
            dimension_semantics=("parallel", "parallel"),
            vmem_limit_bytes=32 * 1024 * 1024,
        ),
    )(a, n)

    def from_planes(o):
        o = o.reshape(B, C, hw_pad)
        if hw_pad != hw:
            o = o[:, :, :hw]
        return o.reshape(B, C, H, W)

    return from_planes(out_a), from_planes(out_n)


@functools.partial(jax.jit, static_argnames=("p",), donate_argnums=(0, 1))
def ext_random_grayscale(anchor, nanchor, key, p=0.1):
    """Pallas implementation of ExtRandomGrayscale.forward."""
    assert anchor.shape == nanchor.shape, "anchor/nanchor must match in shape"
    B, C, H, W = anchor.shape
    assert C == 3, "kernel implements the 3-channel (RGB) case"

    # Single coin flip (matches torch.rand(1) < p), applied to both images.
    u = jax.random.uniform(key, (), dtype=jnp.float32)
    apply_gray = u < jnp.float32(p)

    # Branch hoisted out of the kernel: passthrough never touches the images.
    out_a, out_n = lax.cond(
        apply_gray,
        _grayscale_pallas,
        lambda a, n: (a, n),
        anchor, nanchor,
    )
    return (out_a, out_n), apply_gray


def _reference_gray(x):
    g = _RW * x[:, 0:1] + _GW * x[:, 1:2] + _BW * x[:, 2:3]
    return jnp.broadcast_to(g, x.shape).astype(x.dtype)


if __name__ == "__main__":
    root = jax.random.PRNGKey(0)
    k_a, k_n, k_coin = jax.random.split(root, 3)

    def make_pair(shape):
        # Deterministic: same keys -> identical values each time, so we can
        # regenerate copies for reference checks (inputs are donated).
        a = jax.random.uniform(k_a, shape, dtype=jnp.float32)
        n = jax.random.uniform(k_n, shape, dtype=jnp.float32)
        return a, n

    # --- test 1: p=1.0 (grayscale path), lane-aligned spatial size ---
    shape = (2, 3, 16, 16)
    a, n = make_pair(shape)           # donated
    a_keep, n_keep = make_pair(shape)  # identical values, kept for reference
    (ga, gn), flag = ext_random_grayscale(a, n, k_coin, p=1.0)
    ga = jax.block_until_ready(ga)
    gn = jax.block_until_ready(gn)
    assert bool(jax.device_get(flag)), "p=1.0 must take the grayscale branch"
    assert jnp.allclose(ga, _reference_gray(a_keep), atol=1e-6), "anchor mismatch"
    assert jnp.allclose(gn, _reference_gray(n_keep), atol=1e-6), "nanchor mismatch"
    assert jnp.allclose(ga[:, 0], ga[:, 1]) and jnp.allclose(ga[:, 1], ga[:, 2])

    # --- test 2: p=0.0 (passthrough path) ---
    a, n = make_pair(shape)
    a_keep, n_keep = make_pair(shape)
    (pa, pn), flag0 = ext_random_grayscale(a, n, k_coin, p=0.0)
    pa = jax.block_until_ready(pa)
    pn = jax.block_until_ready(pn)
    assert not bool(jax.device_get(flag0))
    assert jnp.allclose(pa, a_keep) and jnp.allclose(pn, n_keep)

    # --- test 3: non-128-aligned H*W (20*24=480) -> lane pad + ragged block ---
    shape2 = (1, 3, 20, 24)
    a2, n2 = make_pair(shape2)
    a2_keep, n2_keep = make_pair(shape2)
    (ga2, gn2), _ = ext_random_grayscale(a2, n2, k_coin, p=1.0)
    ga2 = jax.block_until_ready(ga2)
    gn2 = jax.block_until_ready(gn2)
    assert jnp.allclose(ga2, _reference_gray(a2_keep), atol=1e-6)
    assert jnp.allclose(gn2, _reference_gray(n2_keep), atol=1e-6)

    # --- test 4: B=1 multi-tile path (rows=16 -> rebalanced to 2 row tiles) ---
    shape3 = (1, 3, 32, 64)
    a3, n3 = make_pair(shape3)
    a3_keep, n3_keep = make_pair(shape3)
    (ga3, gn3), _ = ext_random_grayscale(a3, n3, k_coin, p=1.0)
    ga3 = jax.block_until_ready(ga3)
    gn3 = jax.block_until_ready(gn3)
    assert jnp.allclose(ga3, _reference_gray(a3_keep), atol=1e-6)
    assert jnp.allclose(gn3, _reference_gray(n3_keep), atol=1e-6)

    print("KERNEL_OK")
</pallas_src>

<mosaic_0001>
module attributes {stable_mosaic.version = 11 : i64} {
  func.func @_grayscale_kernel(%arg0: i32, %arg1: i32, %arg2: memref<1x3x2x128xf32, #tpu.memory_space<vmem>>, %arg3: memref<1x3x2x128xf32, #tpu.memory_space<vmem>>, %arg4: memref<1x3x2x128xf32, #tpu.memory_space<vmem>>, %arg5: memref<1x3x2x128xf32, #tpu.memory_space<vmem>>) attributes {dimension_semantics = [#tpu.dimension_semantics<parallel>, #tpu.dimension_semantics<parallel>], iteration_bounds = array<i64: 2, 1>, scalar_prefetch = 0 : i64, scratch_operands = 0 : i64, tpu.core_type = #tpu.core_type<tc>, window_params = [{transform_indices = @transform_0, window_bounds = array<i64: 1, 3, 2, 128>}, {transform_indices = @transform_1, window_bounds = array<i64: 1, 3, 2, 128>}, {transform_indices = @transform_2, window_bounds = array<i64: 1, 3, 2, 128>}, {transform_indices = @transform_3, window_bounds = array<i64: 1, 3, 2, 128>}]} {
    %c0_i32 = arith.constant 0 : i32
    %c2_i32 = arith.constant 2 : i32
    %0 = arith.muli %c0_i32, %c2_i32 : i32
    %1 = tpu.assume_multiple %0, 2 : i32
    %c0 = arith.constant 0 : index
    %c0_0 = arith.constant 0 : index
    %2 = arith.index_cast %1 : i32 to index
    %c0_1 = arith.constant 0 : index
    %3 = vector.load %arg2[%c0, %c0_0, %2, %c0_1] : memref<1x3x2x128xf32, #tpu.memory_space<vmem>>, vector<1x1x2x128xf32>
    %4 = vector.shape_cast %3 : vector<1x1x2x128xf32> to vector<2x128xf32>
    %c0_2 = arith.constant 0 : index
    %c1 = arith.constant 1 : index
    %5 = arith.index_cast %1 : i32 to index
    %c0_3 = arith.constant 0 : index
    %6 = vector.load %arg2[%c0_2, %c1, %5, %c0_3] : memref<1x3x2x128xf32, #tpu.memory_space<vmem>>, vector<1x1x2x128xf32>
    %7 = vector.shape_cast %6 : vector<1x1x2x128xf32> to vector<2x128xf32>
    %c0_4 = arith.constant 0 : index
    %c2 = arith.constant 2 : index
    %8 = arith.index_cast %1 : i32 to index
    %c0_5 = arith.constant 0 : index
    %9 = vector.load %arg2[%c0_4, %c2, %8, %c0_5] : memref<1x3x2x128xf32, #tpu.memory_space<vmem>>, vector<1x1x2x128xf32>
    %10 = vector.shape_cast %9 : vector<1x1x2x128xf32> to vector<2x128xf32>
    %cst = arith.constant 2.989000e-01 : f32
    %11 = vector.broadcast %cst : f32 to vector<2x128xf32>
    %12 = arith.mulf %11, %4 : vector<2x128xf32>
    %cst_6 = arith.constant 5.870000e-01 : f32
    %13 = vector.broadcast %cst_6 : f32 to vector<2x128xf32>
    %14 = arith.mulf %13, %7 : vector<2x128xf32>
    %15 = arith.addf %12, %14 : vector<2x128xf32>
    %cst_7 = arith.constant 1.140000e-01 : f32
    %16 = vector.broadcast %cst_7 : f32 to vector<2x128xf32>
    %17 = arith.mulf %16, %10 : vector<2x128xf32>
    %18 = arith.addf %15, %17 : vector<2x128xf32>
    %c0_8 = arith.constant 0 : index
    %c0_9 = arith.constant 0 : index
    %19 = arith.index_cast %1 : i32 to index
    %c0_10 = arith.constant 0 : index
    %20 = vector.load %arg4[%c0_8, %c0_9, %19, %c0_10] : memref<1x3x2x128xf32, #tpu.memory_space<vmem>>, vector<1x1x2x128xf32>
    %21 = vector.shape_cast %20 : vector<1x1x2x128xf32> to vector<2x128xf32>
    %22 = vector.shape_cast %18 : vector<2x128xf32> to vector<1x1x2x128xf32>
    tpu.vector_store %arg4[%c0_8, %c0_9, %19, %c0_10], %22 {strides = array<i32>} : memref<1x3x2x128xf32, #tpu.memory_space<vmem>>, vector<1x1x2x128xf32>,
    %c0_11 = arith.constant 0 : index
    %c1_12 = arith.constant 1 : index
    %23 = arith.index_cast %1 : i32 to index
    %c0_13 = arith.constant 0 : index
    %24 = vector.load %arg4[%c0_11, %c1_12, %23, %c0_13] : memref<1x3x2x128xf32, #tpu.memory_space<vmem>>, vector<1x1x2x128xf32>
    %25 = vector.shape_cast %24 : vector<1x1x2x128xf32> to vector<2x128xf32>
    %26 = vector.shape_cast %18 : vector<2x128xf32> to vector<1x1x2x128xf32>
    tpu.vector_store %arg4[%c0_11, %c1_12, %23, %c0_13], %26 {strides = array<i32>} : memref<1x3x2x128xf32, #tpu.memory_space<vmem>>, vector<1x1x2x128xf32>,
    %c0_14 = arith.constant 0 : index
    %c2_15 = arith.constant 2 : index
    %27 = arith.index_cast %1 : i32 to index
    %c0_16 = arith.constant 0 : index
    %28 = vector.load %arg4[%c0_14, %c2_15, %27, %c0_16] : memref<1x3x2x128xf32, #tpu.memory_space<vmem>>, vector<1x1x2x128xf32>
    %29 = vector.shape_cast %28 : vector<1x1x2x128xf32> to vector<2x128xf32>
    %30 = vector.shape_cast %18 : vector<2x128xf32> to vector<1x1x2x128xf32>
    tpu.vector_store %arg4[%c0_14, %c2_15, %27, %c0_16], %30 {strides = array<i32>} : memref<1x3x2x128xf32, #tpu.memory_space<vmem>>, vector<1x1x2x128xf32>,
    %c1_i32 = arith.constant 1 : i32
    %c0_i32_17 = arith.constant 0 : i32
    %c2_i32_18 = arith.constant 2 : i32
    %31 = arith.muli %c0_i32_17, %c2_i32_18 : i32
    %32 = tpu.assume_multiple %31, 2 : i32
    %c0_19 = arith.constant 0 : index
    %c0_20 = arith.constant 0 : index
    %33 = arith.index_cast %32 : i32 to index
    %c0_21 = arith.constant 0 : index
    %34 = vector.load %arg3[%c0_19, %c0_20, %33, %c0_21] : memref<1x3x2x128xf32, #tpu.memory_space<vmem>>, vector<1x1x2x128xf32>
    %35 = vector.shape_cast %34 : vector<1x1x2x128xf32> to vector<2x128xf32>
    %c0_22 = arith.constant 0 : index
    %c1_23 = arith.constant 1 : index
    %36 = arith.index_cast %32 : i32 to index
    %c0_24 = arith.constant 0 : index
    %37 = vector.load %arg3[%c0_22, %c1_23, %36, %c0_24] : memref<1x3x2x128xf32, #tpu.memory_space<vmem>>, vector<1x1x2x128xf32>
    %38 = vector.shape_cast %37 : vector<1x1x2x128xf32> to vector<2x128xf32>
    %c0_25 = arith.constant 0 : index
    %c2_26 = arith.constant 2 : index
    %39 = arith.index_cast %32 : i32 to index
    %c0_27 = arith.constant 0 : index
    %40 = vector.load %arg3[%c0_25, %c2_26, %39, %c0_27] : memref<1x3x2x128xf32, #tpu.memory_space<vmem>>, vector<1x1x2x128xf32>
    %41 = vector.shape_cast %40 : vector<1x1x2x128xf32> to vector<2x128xf32>
    %cst_28 = arith.constant 2.989000e-01 : f32
    %42 = vector.broadcast %cst_28 : f32 to vector<2x128xf32>
    %43 = arith.mulf %42, %35 : vector<2x128xf32>
    %cst_29 = arith.constant 5.870000e-01 : f32
    %44 = vector.broadcast %cst_29 : f32 to vector<2x128xf32>
    %45 = arith.mulf %44, %38 : vector<2x128xf32>
    %46 = arith.addf %43, %45 : vector<2x128xf32>
    %cst_30 = arith.constant 1.140000e-01 : f32
    %47 = vector.broadcast %cst_30 : f32 to vector<2x128xf32>
    %48 = arith.mulf %47, %41 : vector<2x128xf32>
    %49 = arith.addf %46, %48 : vector<2x128xf32>
    %c0_31 = arith.constant 0 : index
    %c0_32 = arith.constant 0 : index
    %50 = arith.index_cast %32 : i32 to index
    %c0_33 = arith.constant 0 : index
    %51 = vector.load %arg5[%c0_31, %c0_32, %50, %c0_33] : memref<1x3x2x128xf32, #tpu.memory_space<vmem>>, vector<1x1x2x128xf32>
    %52 = vector.shape_cast %51 : vector<1x1x2x128xf32> to vector<2x128xf32>
    %53 = vector.shape_cast %49 : vector<2x128xf32> to vector<1x1x2x128xf32>
    tpu.vector_store %arg5[%c0_31, %c0_32, %50, %c0_33], %53 {strides = array<i32>} : memref<1x3x2x128xf32, #tpu.memory_space<vmem>>, vector<1x1x2x128xf32>,
    %c0_34 = arith.constant 0 : index
    %c1_35 = arith.constant 1 : index
    %54 = arith.index_cast %32 : i32 to index
    %c0_36 = arith.constant 0 : index
    %55 = vector.load %arg5[%c0_34, %c1_35, %54, %c0_36] : memref<1x3x2x128xf32, #tpu.memory_space<vmem>>, vector<1x1x2x128xf32>
    %56 = vector.shape_cast %55 : vector<1x1x2x128xf32> to vector<2x128xf32>
    %57 = vector.shape_cast %49 : vector<2x128xf32> to vector<1x1x2x128xf32>
    tpu.vector_store %arg5[%c0_34, %c1_35, %54, %c0_36], %57 {strides = array<i32>} : memref<1x3x2x128xf32, #tpu.memory_space<vmem>>, vector<1x1x2x128xf32>,
    %c0_37 = arith.constant 0 : index
    %c2_38 = arith.constant 2 : index
    %58 = arith.index_cast %32 : i32 to index
    %c0_39 = arith.constant 0 : index
    %59 = vector.load %arg5[%c0_37, %c2_38, %58, %c0_39] : memref<1x3x2x128xf32, #tpu.memory_space<vmem>>, vector<1x1x2x128xf32>
    %60 = vector.shape_cast %59 : vector<1x1x2x128xf32> to vector<2x128xf32>
    %61 = vector.shape_cast %49 : vector<2x128xf32> to vector<1x1x2x128xf32>
    tpu.vector_store %arg5[%c0_37, %c2_38, %58, %c0_39], %61 {strides = array<i32>} : memref<1x3x2x128xf32, #tpu.memory_space<vmem>>, vector<1x1x2x128xf32>,
    %c1_i32_40 = arith.constant 1 : i32
    return
  }
  func.func @transform_0(%arg0: i32, %arg1: i32) -> (i32, i32, i32, i32) {
    %c0_i32 = arith.constant 0 : i32
    %c0_i32_0 = arith.constant 0 : i32
    %c0_i32_1 = arith.constant 0 : i32
    return %arg0, %c0_i32, %arg1, %c0_i32_0 : i32, i32, i32, i32
  }
  func.func @transform_1(%arg0: i32, %arg1: i32) -> (i32, i32, i32, i32) {
    %c0_i32 = arith.constant 0 : i32
    %c0_i32_0 = arith.constant 0 : i32
    %c0_i32_1 = arith.constant 0 : i32
    return %arg0, %c0_i32, %arg1, %c0_i32_0 : i32, i32, i32, i32
  }
  func.func @transform_2(%arg0: i32, %arg1: i32) -> (i32, i32, i32, i32) {
    %c0_i32 = arith.constant 0 : i32
    %c0_i32_0 = arith.constant 0 : i32
    %c0_i32_1 = arith.constant 0 : i32
    return %arg0, %c0_i32, %arg1, %c0_i32_0 : i32, i32, i32, i32
  }
  func.func @transform_3(%arg0: i32, %arg1: i32) -> (i32, i32, i32, i32) {
    %c0_i32 = arith.constant 0 : i32
    %c0_i32_0 = arith.constant 0 : i32
    %c0_i32_1 = arith.constant 0 : i32
    return %arg0, %c0_i32, %arg1, %c0_i32_0 : i32, i32, i32, i32
  }
}

</mosaic_0001>

<llo_original>
// kernel: branch_1_fun.1
$region0: #{branch_1_fun.1}
  #allocation0 [shape = 'u32[]', space=smem, size = 0x4, offset = 0x4, fixed_abs, tag = 'smem constant byte address 0x4 - core index']
  #allocation1 [shape = 'u32[144,128]{1,0:T(1,128)}', space=vmem, size = 0x12000, scoped, tag = 'internal scratch']
  %s0 = inlined_call_operand.vmem [shape: f32[2,3,2,128], index: 0, kind: input, shape index: {}, may-alias: {0,2}]
  %s1 = inlined_call_operand.vmem [shape: f32[2,3,2,128], index: 1, kind: input, shape index: {}, may-alias: {1,3}]
  %s2 = inlined_call_operand.vmem [shape: f32[2,3,2,128], index: 2, kind: output, shape index: {0}, may-alias: {0,2}]
  %s3 = inlined_call_operand.vmem [shape: f32[2,3,2,128], index: 3, kind: output, shape index: {1}, may-alias: {1,3}]
  %4 = xla_tuple %s2, %s3
  %s5 = sld [smem:[#allocation0]]
  $region49: #{branch_1_fun.1} parent=0
    _
  %s7 = ssub.s32 1, %s5
  %s8 = scalar_select 0, %s7, %s5
  loop: start=0, step=1, limit=4
  $region2: #{branch_1_fun.1} parent=0 // loop_pre_header
    _
  $region3: #{branch_1_fun.1} parent=0 // loop_header
    %s10 = sphi 0, %s14
    %p11 = scmp.ge.s32.totalorder %s10, 4
    %s17 = sphi 0, %s29
    %s18 = sphi 0, %s25
    %s19 = sphi 0, %s17
    %s20 = sphi 0, %s18
    %s21 = sphi 0, %s19
    %s22 = sphi 0, %s20
    %s34 = sphi 0, %s36
    %s37 = sphi 0, %s34
    %s38 = sphi 0, %s37
    %s54 = sphi 0, %s38
    %s62 = sphi 0, %s64
    %s65 = sphi 0, %s62
    %s66 = sphi 0, %s65
    %s82 = sphi 0, %s66
    %s90 = sphi 0, %s92
    %s93 = sphi 0, %s90
    %s94 = sphi 0, %s93
    %s110 = sphi 0, %s94
    %s118 = sphi 0, %s120
    %s121 = sphi 0, %s118
    %s122 = sphi 0, %s121
    %s138 = sphi 0, %s122
  $region4: #{branch_1_fun.1} parent=0 // loop_header_branch
    %13 = sbr.rel (%p11) target = $region8
  $region5: #{branch_1_fun.1} parent=0 // loop_body
    %s15 = ssub.s32 %s10, 1
    %s16 = ssub.s32 %s10, 2
    %s23 = sadd.s32 1, %s18
    %p24 = scmp.ge.s32.totalorder %s23, 1
    %s25 = scalar_select %p24, 0, %s23
    %s26 = sadd.s32 1, %s17
    %s27 = scalar_select %p24, %s26, %s17
    %p28 = scmp.ge.s32.totalorder %s27, 2
    %s29 = scalar_select %p28, 0, %s27
    %s30 = ssub.s32 %s17, %s29
    %s31 = ssub.s32 %s18, %s25
    %s32 = sor.u32 %s30, %s31
    %p33 = scmp.eq.s32.totalorder %s32, 0
    %s35 = sadd.s32 %s34, 1
    %s36 = scalar_select %p33, %s34, %s35
    %p39 = pneg %p33
    %p40 = scmp.eq.s32.totalorder %s10, 1
    %p41 = por %p39, %p40
    %p42 = scmp.ne.s32.totalorder %s34, %s37
    %p43 = scmp.eq.s32.totalorder %s10, 0
    %p44 = por %p42, %p43
    %p45 = scmp.ne.s32.totalorder %s34, %s37
    %p46 = scmp.eq.s32.totalorder %s15, 1
    %p47 = por %p45, %p46
    %p48 = scmp.ne.s32.totalorder %s37, %s38
    %p49 = scmp.eq.s32.totalorder %s15, 0
    %p50 = por %p48, %p49
    %p51 = scmp.ne.s32.totalorder %s37, %s38
    %p52 = scmp.eq.s32.totalorder %s16, 1
    %p53 = por %p51, %p52
    %p55 = scmp.ne.s32.totalorder %s38, %s54
    %p56 = scmp.eq.s32.totalorder %s16, 0
    %p57 = por %p55, %p56
    %s58 = ssub.s32 %s17, %s29
    %s59 = ssub.s32 %s18, %s25
    %s60 = sor.u32 %s58, %s59
    %p61 = scmp.eq.s32.totalorder %s60, 0
    %s63 = sadd.s32 %s62, 1
    %s64 = scalar_select %p61, %s62, %s63
    %p67 = pneg %p61
    %p68 = scmp.eq.s32.totalorder %s10, 1
    %p69 = por %p67, %p68
    %p70 = scmp.ne.s32.totalorder %s62, %s65
    %p71 = scmp.eq.s32.totalorder %s10, 0
    %p72 = por %p70, %p71
    %p73 = scmp.ne.s32.totalorder %s62, %s65
    %p74 = scmp.eq.s32.totalorder %s15, 1
    %p75 = por %p73, %p74
    %p76 = scmp.ne.s32.totalorder %s65, %s66
    %p77 = scmp.eq.s32.totalorder %s15, 0
    %p78 = por %p76, %p77
    %p79 = scmp.ne.s32.totalorder %s65, %s66
    %p80 = scmp.eq.s32.totalorder %s16, 1
    %p81 = por %p79, %p80
    %p83 = scmp.ne.s32.totalorder %s66, %s82
    %p84 = scmp.eq.s32.totalorder %s16, 0
    %p85 = por %p83, %p84
    %s86 = ssub.s32 %s17, %s29
    %s87 = ssub.s32 %s18, %s25
    %s88 = sor.u32 %s86, %s87
    %p89 = scmp.eq.s32.totalorder %s88, 0
    %s91 = sadd.s32 %s90, 1
    %s92 = scalar_select %p89, %s90, %s91
    %p95 = pneg %p89
    %p96 = scmp.eq.s32.totalorder %s10, 1
    %p97 = por %p95, %p96
    %p98 = scmp.ne.s32.totalorder %s90, %s93
    %p99 = scmp.eq.s32.totalorder %s10, 0
    %p100 = por %p98, %p99
    %p101 = scmp.ne.s32.totalorder %s90, %s93
    %p102 = scmp.eq.s32.totalorder %s15, 1
    %p103 = por %p101, %p102
    %p104 = scmp.ne.s32.totalorder %s93, %s94
    %p105 = scmp.eq.s32.totalorder %s15, 0
    %p106 = por %p104, %p105
    %p107 = scmp.ne.s32.totalorder %s93, %s94
    %p108 = scmp.eq.s32.totalorder %s16, 1
    %p109 = por %p107, %p108
    %p111 = scmp.ne.s32.totalorder %s94, %s110
    %p112 = scmp.eq.s32.totalorder %s16, 0
    %p113 = por %p111, %p112
    %s114 = ssub.s32 %s17, %s29
    %s115 = ssub.s32 %s18, %s25
    %s116 = sor.u32 %s114, %s115
    %p117 = scmp.eq.s32.totalorder %s116, 0
    %s119 = sadd.s32 %s118, 1
    %s120 = scalar_select %p117, %s118, %s119
    %p123 = pneg %p117
    %p124 = scmp.eq.s32.totalorder %s10, 1
    %p125 = por %p123, %p124
    %p126 = scmp.ne.s32.totalorder %s118, %s121
    %p127 = scmp.eq.s32.totalorder %s10, 0
    %p128 = por %p126, %p127
    %p129 = scmp.ne.s32.totalorder %s118, %s121
    %p130 = scmp.eq.s32.totalorder %s15, 1
    %p131 = por %p129, %p130
    %p132 = scmp.ne.s32.totalorder %s121, %s122
    %p133 = scmp.eq.s32.totalorder %s15, 0
    %p134 = por %p132, %p133
    %p135 = scmp.ne.s32.totalorder %s121, %s122
    %p136 = scmp.eq.s32.totalorder %s16, 1
    %p137 = por %p135, %p136
    %p139 = scmp.ne.s32.totalorder %s122, %s138
    %p140 = scmp.eq.s32.totalorder %s16, 0
    %p141 = por %p139, %p140
    %p142 = scmp.le.s32.totalorder 1, %s10
    %p143 = scmp.lt.s32.totalorder %s10, 3
    %p144 = pnand %p142, %p143
    %p145 = pneg %p144
    // Predicated region
    $region9: #{branch_1_fun.1} parent=5 // pred_check
      _
    $region10: #{branch_1_fun.1} parent=5 // pred_check_branch
      %147 = sbr.rel (%p144) target = $region12
    $region11: #{branch_1_fun.1} parent=5 // pred_region
      %s148 = ssub.s32 %s10, 1
    $region12: #{branch_1_fun.1} parent=5 // pred_fallthru
      _
    %p149 = scmp.lt.s32.totalorder %s10, 2
    // Predicated region
    $region13: #{branch_1_fun.1} parent=5 // pred_check
      %p150 = pneg %p149
    $region14: #{branch_1_fun.1} parent=5 // pred_check_branch
      %152 = sbr.rel (%p150) target = $region16
    $region15: #{branch_1_fun.1} parent=5 // pred_region
      // Predicated region
      $region17: #{branch_1_fun.1} parent=15 // pred_check
        %p153 = pneg %p44
      $region18: #{branch_1_fun.1} parent=15 // pred_check_branch
        %155 = sbr.rel (%p153) target = $region20
      $region19: #{branch_1_fun.1} parent=15 // pred_region
        %p156 = scmp.lt.s32.totalorder %s17, 1
        %s157 = scalar_select %p156, %s17, 1
        %p158 = scmp.lt.s32.totalorder %s18, 0
        %s159 = scalar_select %p158, %s18, 0
        %s160 = smul.addr %s157, 3
        %s161 = sadd.s32 %s159, %s160
        %s162 = smul.addr %s161, 2
        %s163 = scalar_lea.vmem %s0, %s162
      $region20: #{branch_1_fun.1} parent=15 // pred_fallthru
        _
      // Predicated region
      $region21: #{branch_1_fun.1} parent=15 // pred_check
        %p164 = pneg %p72
      $region22: #{branch_1_fun.1} parent=15 // pred_check_branch
        %166 = sbr.rel (%p164) target = $region24
      $region23: #{branch_1_fun.1} parent=15 // pred_region
        %p167 = scmp.lt.s32.totalorder %s17, 1
        %s168 = scalar_select %p167, %s17, 1
        %p169 = scmp.lt.s32.totalorder %s18, 0
        %s170 = scalar_select %p169, %s18, 0
        %s171 = smul.addr %s168, 3
        %s172 = sadd.s32 %s170, %s171
        %s173 = smul.addr %s172, 2
        %s174 = scalar_lea.vmem %s1, %s173
      $region24: #{branch_1_fun.1} parent=15 // pred_fallthru
        _
    $region16: #{branch_1_fun.1} parent=5 // pred_fallthru
      _
    %p175 = scmp.le.s32.totalorder 1, %s10
    %p176 = scmp.lt.s32.totalorder %s10, 3
    %p177 = pnand %p175, %p176
    %p178 = pneg %p177
    // Predicated region
    $region25: #{branch_1_fun.1} parent=5 // pred_check
      _
    $region26: #{branch_1_fun.1} parent=5 // pred_check_branch
      %180 = sbr.rel (%p177) target = $region28
    $region27: #{branch_1_fun.1} parent=5 // pred_region
      %s181 = ssub.s32 %s10, 1
      %p182 = scmp.lt.s32.totalorder %s19, 1
      %s183 = scalar_select %p182, %s19, 1
      %p184 = scmp.lt.s32.totalorder %s20, 0
      %s185 = scalar_select %p184, %s20, 0
      %s186 = smul.addr %s183, 3
      %s187 = sadd.s32 %s185, %s186
      %s188 = smul.addr %s187, 2
      %s189 = scalar_lea.vmem %s0, %s188
      %p190 = pneg %p50
      %p191 = pneg %p47
      %p192 = scmp.lt.s32.totalorder %s19, 1
      %s193 = scalar_select %p192, %s19, 1
      %p194 = scmp.lt.s32.totalorder %s20, 0
      %s195 = scalar_select %p194, %s20, 0
      %s196 = smul.addr %s193, 3
      %s197 = sadd.s32 %s195, %s196
      %s198 = smul.addr %s197, 2
      %s199 = scalar_lea.vmem %s1, %s198
      %p200 = pneg %p78
      %p201 = pneg %p75
      %p202 = pneg %p106
      %p203 = pneg %p103
      %p204 = scmp.lt.s32.totalorder %s19, 1
      %s205 = scalar_select %p204, %s19, 1
      %p206 = scmp.lt.s32.totalorder %s20, 0
      %s207 = scalar_select %p206, %s20, 0
      %s208 = smul.addr %s205, 3
      %s209 = sadd.s32 %s207, %s208
      %s210 = smul.addr %s209, 2
      %s211 = scalar_lea.vmem %s2, %s210
      %p212 = pneg %p134
      %p213 = pneg %p131
      %p214 = scmp.lt.s32.totalorder %s19, 1
      %s215 = scalar_select %p214, %s19, 1
      %p216 = scmp.lt.s32.totalorder %s20, 0
      %s217 = scalar_select %p216, %s20, 0
      %s218 = smul.addr %s215, 3
      %s219 = sadd.s32 %s217, %s218
      %s220 = smul.addr %s219, 2
      %s221 = scalar_lea.vmem %s3, %s220
      %p222 = scmp.lt.s32.totalorder %s19, 1
      %s223 = scalar_select %p222, %s19, 1
      %p224 = scmp.lt.s32.totalorder %s20, 0
      %s225 = scalar_select %p224, %s20, 0
      %s226 = smul.addr %s223, 3
      %s227 = sadd.s32 %s225, %s226
      %s228 = smul.addr %s227, 2
      %s229 = scalar_lea.vmem %s0, %s228
      %p230 = scmp.lt.s32.totalorder %s19, 1
      %s231 = scalar_select %p230, %s19, 1
      %p232 = scmp.lt.s32.totalorder %s20, 0
      %s233 = scalar_select %p232, %s20, 0
      %s234 = smul.addr %s231, 3
      %s235 = sadd.s32 %s233, %s234
      %s236 = smul.addr %s235, 2
      %s237 = scalar_lea.vmem %s1, %s236
      %p238 = scmp.lt.s32.totalorder %s19, 1
      %s239 = scalar_select %p238, %s19, 1
      %p240 = scmp.lt.s32.totalorder %s20, 0
      %s241 = scalar_select %p240, %s20, 0
      %s242 = smul.addr %s239, 3
      %s243 = sadd.s32 %s241, %s242
      %s244 = smul.addr %s243, 2
      %s245 = scalar_lea.vmem %s2, %s244
      %p246 = scmp.lt.s32.totalorder %s19, 1
      %s247 = scalar_select %p246, %s19, 1
      %p248 = scmp.lt.s32.totalorder %s20, 0
      %s249 = scalar_select %p248, %s20, 0
      %s250 = smul.addr %s247, 3
      %s251 = sadd.s32 %s249, %s250
      %s252 = smul.addr %s251, 2
      %s253 = scalar_lea.vmem %s3, %s252
      %v254 = vld [vmem:[%s229] sm:$0x3]
      %s255 = sadd.s32 0, 2
      %s256 = scalar_lea.vmem %s229, %s255
      %v257 = vld [vmem:[%s256] sm:$0x3]
      %s258 = sadd.s32 0, 4
      %s259 = scalar_lea.vmem %s229, %s258
      %v260 = vld [vmem:[%s259] sm:$0x3]
      %v261 = vmul.f32 %v254, 0.2989
      %v262 = vmul.f32 %v257, 0.587
      %v263 = vadd.f32 %v261, %v262
      %v264 = vmul.f32 %v260, 0.114
      %v265 = vadd.f32 %v263, %v264
      %266 = vst [vmem:[%s245] sm:$0x3] %v265
      %s267 = scalar_lea.vmem %s245, %s255
      %268 = vst [vmem:[%s267] sm:$0x3] %v265
      %s269 = scalar_lea.vmem %s245, %s258
      %270 = vst [vmem:[%s269] sm:$0x3] %v265
      %v271 = vld [vmem:[%s237] sm:$0x3]
      %s272 = scalar_lea.vmem %s237, %s255
      %v273 = vld [vmem:[%s272] sm:$0x3]
      %s274 = scalar_lea.vmem %s237, %s258
      %v275 = vld [vmem:[%s274] sm:$0x3]
      %v276 = vmul.f32 %v271, 0.2989
      %v277 = vmul.f32 %v273, 0.587
      %v278 = vadd.f32 %v276, %v277
      %v279 = vmul.f32 %v275, 0.114
      %v280 = vadd.f32 %v278, %v279
      %281 = vst [vmem:[%s253] sm:$0x3] %v280
      %s282 = scalar_lea.vmem %s253, %s255
      %283 = vst [vmem:[%s282] sm:$0x3] %v280
      %s284 = scalar_lea.vmem %s253, %s258
      %285 = vst [vmem:[%s284] sm:$0x3] %v280
      %p286 = scmp.lt.s32.totalorder %s19, 1
      %s287 = scalar_select %p286, %s19, 1
      %p288 = scmp.lt.s32.totalorder %s20, 0
      %s289 = scalar_select %p288, %s20, 0
      %s290 = smul.addr %s287, 3
      %s291 = sadd.s32 %s289, %s290
      %s292 = smul.addr %s291, 2
      %s293 = scalar_lea.vmem %s2, %s292
      %p294 = scmp.lt.s32.totalorder %s19, 1
      %s295 = scalar_select %p294, %s19, 1
      %p296 = scmp.lt.s32.totalorder %s20, 0
      %s297 = scalar_select %p296, %s20, 0
      %s298 = smul.addr %s295, 3
      %s299 = sadd.s32 %s297, %s298
      %s300 = smul.addr %s299, 2
      %s301 = scalar_lea.vmem %s3, %s300
      // Predicated region
      $region29: #{branch_1_fun.1} parent=27 // pred_check
        %p302 = pneg %p103
      $region30: #{branch_1_fun.1} parent=27 // pred_check_branch
        %304 = sbr.rel (%p302) target = $region32
      $region31: #{branch_1_fun.1} parent=27 // pred_region
        _
      $region32: #{branch_1_fun.1} parent=27 // pred_fallthru
        _
      // Predicated region
      $region33: #{branch_1_fun.1} parent=27 // pred_check
        %p305 = pneg %p131
      $region34: #{branch_1_fun.1} parent=27 // pred_check_branch
        %307 = sbr.rel (%p305) target = $region36
      $region35: #{branch_1_fun.1} parent=27 // pred_region
        _
      $region36: #{branch_1_fun.1} parent=27 // pred_fallthru
        _
    $region28: #{branch_1_fun.1} parent=5 // pred_fallthru
      _
    %p308 = scmp.le.s32.totalorder 2, %s10
    // Predicated region
    $region37: #{branch_1_fun.1} parent=5 // pred_check
      %p309 = pneg %p308
    $region38: #{branch_1_fun.1} parent=5 // pred_check_branch
      %311 = sbr.rel (%p309) target = $region40
    $region39: #{branch_1_fun.1} parent=5 // pred_region
      %s312 = ssub.s32 %s10, 2
      // Predicated region
      $region41: #{branch_1_fun.1} parent=39 // pred_check
        %p313 = pneg %p109
      $region42: #{branch_1_fun.1} parent=39 // pred_check_branch
        %315 = sbr.rel (%p313) target = $region44
      $region43: #{branch_1_fun.1} parent=39 // pred_region
        %p316 = scmp.lt.s32.totalorder %s21, 1
        %s317 = scalar_select %p316, %s21, 1
        %p318 = scmp.lt.s32.totalorder %s22, 0
        %s319 = scalar_select %p318, %s22, 0
        %s320 = smul.addr %s317, 3
        %s321 = sadd.s32 %s319, %s320
        %s322 = smul.addr %s321, 2
        %s323 = scalar_lea.vmem %s2, %s322
      $region44: #{branch_1_fun.1} parent=39 // pred_fallthru
        _
      // Predicated region
      $region45: #{branch_1_fun.1} parent=39 // pred_check
        %p324 = pneg %p137
      $region46: #{branch_1_fun.1} parent=39 // pred_check_branch
        %326 = sbr.rel (%p324) target = $region48
      $region47: #{branch_1_fun.1} parent=39 // pred_region
        %p327 = scmp.lt.s32.totalorder %s21, 1
        %s328 = scalar_select %p327, %s21, 1
        %p329 = scmp.lt.s32.totalorder %s22, 0
        %s330 = scalar_select %p329, %s22, 0
        %s331 = smul.addr %s328, 3
        %s332 = sadd.s32 %s330, %s331
        %s333 = smul.addr %s332, 2
        %s334 = scalar_lea.vmem %s3, %s333
      $region48: #{branch_1_fun.1} parent=39 // pred_fallthru
        _
    $region40: #{branch_1_fun.1} parent=5 // pred_fallthru
      _
  $region6: #{branch_1_fun.1} parent=0 // loop_footer
    %s14 = sadd.s32 1, %s10
  $region7: #{branch_1_fun.1} parent=0 // loop_footer_branch
    %9 = sbr.rel target = $region3
  $region8: #{branch_1_fun.1} parent=0 // loop_exit
    _

</llo_original>
